<compile_context>
chip_gen: v5e
topology: v5e:2x2
jax: 0.10.0
libtpu: 0.0.40
codegen_flags: <defaults>
</compile_context>

<pallas_src>
import jax
import jax.numpy as jnp
from jax import lax
from jax.experimental import pallas as pl
from jax.experimental.pallas import tpu as pltpu


def identity_forward(x: jax.Array) -> jax.Array:
    """nn.Identity: per the perf review, no kernel and no copy — return x."""
    return x


def _co_training_head_kernel(f1_ref, f2_ref, wt_ref, b_ref,
                             raw_ref, bn1_ref, bn2_ref, acc_ref):
    k = pl.program_id(0)

    @pl.when(k == 0)
    def _init():
        acc_ref[...] = jnp.zeros_like(acc_ref)

    f1 = f1_ref[...].astype(jnp.float32)
    f2 = f2_ref[...].astype(jnp.float32)
    eps = jnp.float32(1e-5)  # PyTorch BatchNorm1d default eps

    # BatchNorm1d(affine=False, track_running_stats=False): normalize each
    # feature with batch statistics (biased variance).  Stats are per-feature,
    # so they are computed independently inside each feature tile.
    m1 = jnp.mean(f1, axis=0, keepdims=True)
    v1 = jnp.mean(jnp.square(f1 - m1), axis=0, keepdims=True)
    bn1_ref[...] = ((f1 - m1) * lax.rsqrt(v1 + eps)).astype(bn1_ref.dtype)

    m2 = jnp.mean(f2, axis=0, keepdims=True)
    v2 = jnp.mean(jnp.square(f2 - m2), axis=0, keepdims=True)
    bn2_ref[...] = ((f2 - m2) * lax.rsqrt(v2 + eps)).astype(bn2_ref.dtype)

    # avg_feature = (f1 + f2) / 2 ; accumulate the partial Linear over this tile.
    avg = (f1 + f2) * jnp.float32(0.5)
    acc_ref[...] += jnp.dot(avg, wt_ref[...].astype(jnp.float32),
                            preferred_element_type=jnp.float32)

    @pl.when(k == pl.num_programs(0) - 1)
    def _finalize():
        raw_ref[...] = (acc_ref[...] + b_ref[...].astype(jnp.float32)
                        ).astype(raw_ref.dtype)


def co_training_head(f1, f2, fc_w, fc_b):
    """Fused (BatchNorm1d x2, average, Linear) head of Co_Training_Model.

    Args:
      f1, f2: [B, F] backbone features (after the Identity fc).
      fc_w:   [C, F] final Linear weight (PyTorch layout).
      fc_b:   [C]    final Linear bias.
    Returns:
      (raw_result [B, C], f1_BN [B, F], f2_BN [B, F])
    """
    B, F = f1.shape
    C, F2 = fc_w.shape
    assert F == F2 and f2.shape == (B, F) and fc_b.shape == (C,)

    wt = fc_w.T              # [F, C] so the in-kernel matmul needs no transpose
    b2d = fc_b.reshape(1, C)

    # Feature-tile: largest lane-dense (multiple-of-128) tile dividing F so
    # each grid step moves a meaningful chunk; otherwise fall back to full F
    # (a full-extent block is always legal).  All blocks here are tiny relative
    # to scoped VMEM on v5e/v6e/v7x.
    tf = F
    for cand in (2048, 1024, 512, 256, 128):
        if F % cand == 0:
            tf = cand
            break
    grid = (F // tf,)

    out_shapes = (
        jax.ShapeDtypeStruct((B, C), f1.dtype),   # raw_result
        jax.ShapeDtypeStruct((B, F), f1.dtype),   # image1_features_BN
        jax.ShapeDtypeStruct((B, F), f1.dtype),   # image2_features_BN
    )

    return pl.pallas_call(
        _co_training_head_kernel,
        out_shape=out_shapes,
        grid=grid,
        in_specs=[
            pl.BlockSpec((B, tf), lambda k: (0, k)),   # f1 tile
            pl.BlockSpec((B, tf), lambda k: (0, k)),   # f2 tile
            pl.BlockSpec((tf, C), lambda k: (k, 0)),   # W^T tile
            pl.BlockSpec((1, C), lambda k: (0, 0)),    # bias (resident)
        ],
        out_specs=(
            pl.BlockSpec((B, C), lambda k: (0, 0)),    # raw (accumulated over k)
            pl.BlockSpec((B, tf), lambda k: (0, k)),   # bn1 tile
            pl.BlockSpec((B, tf), lambda k: (0, k)),   # bn2 tile
        ),
        scratch_shapes=[pltpu.VMEM((B, C), jnp.float32)],  # Linear accumulator
        compiler_params=pltpu.CompilerParams(
            # The single grid axis is a reduction for `raw` (same output block
            # every step), so it must be "arbitrary".
            dimension_semantics=("arbitrary",),
        ),
    )(f1, f2, wt, b2d)


if __name__ == "__main__":
    key = jax.random.PRNGKey(0)
    k1, k2, k3, k4 = jax.random.split(key, 4)

    B = 8            # small batch (>=2 needed for batch-norm statistics)
    NUM_FTRS = 512   # resnet18 fc.in_features
    NUM_CLASSES = 4

    # Stand-ins for model1(image1) / model2(image2) backbone feature outputs.
    feats1 = jax.random.normal(k1, (B, NUM_FTRS), dtype=jnp.float32)
    feats2 = jax.random.normal(k2, (B, NUM_FTRS), dtype=jnp.float32)
    fc_w = 0.02 * jax.random.normal(k3, (NUM_CLASSES, NUM_FTRS), dtype=jnp.float32)
    fc_b = jax.random.normal(k4, (NUM_CLASSES,), dtype=jnp.float32)

    # model1.fc = model2.fc = Identity(): zero-cost pass-through, no kernel.
    feats1 = identity_forward(feats1)
    feats2 = identity_forward(feats2)

    raw, bn1, bn2 = co_training_head(feats1, feats2, fc_w, fc_b)
    jax.block_until_ready((raw, bn1, bn2))

    # Pure-JAX reference of the same forward math.
    def bn_ref(x, eps=1e-5):
        m = x.mean(axis=0, keepdims=True)
        v = jnp.mean((x - m) ** 2, axis=0, keepdims=True)
        return (x - m) / jnp.sqrt(v + eps)

    raw_ref = ((feats1 + feats2) * 0.5) @ fc_w.T + fc_b

    assert raw.shape == (B, NUM_CLASSES), f"raw shape {raw.shape}"
    assert bn1.shape == (B, NUM_FTRS) and bn2.shape == (B, NUM_FTRS)
    assert jnp.allclose(raw, raw_ref, atol=1e-4, rtol=1e-4), "raw_result mismatch"
    assert jnp.allclose(bn1, bn_ref(feats1), atol=1e-4, rtol=1e-4), "BN(feats1) mismatch"
    assert jnp.allclose(bn2, bn_ref(feats2), atol=1e-4, rtol=1e-4), "BN(feats2) mismatch"

    print("KERNEL_OK")
</pallas_src>

<mosaic_0001>
module attributes {stable_mosaic.version = 11 : i64} {
  func.func @_co_training_head_kernel(%arg0: i32, %arg1: memref<8x512xf32, #tpu.memory_space<vmem>>, %arg2: memref<8x512xf32, #tpu.memory_space<vmem>>, %arg3: memref<512x4xf32, #tpu.memory_space<vmem>>, %arg4: memref<1x4xf32, #tpu.memory_space<vmem>>, %arg5: memref<8x4xf32, #tpu.memory_space<vmem>>, %arg6: memref<8x512xf32, #tpu.memory_space<vmem>>, %arg7: memref<8x512xf32, #tpu.memory_space<vmem>>, %arg8: memref<8x4xf32, #tpu.memory_space<vmem>>) attributes {dimension_semantics = [#tpu.dimension_semantics<arbitrary>], iteration_bounds = array<i64: 1>, scalar_prefetch = 0 : i64, scratch_operands = 1 : i64, tpu.core_type = #tpu.core_type<tc>, window_params = [{transform_indices = @transform_0, window_bounds = array<i64: 8, 512>}, {transform_indices = @transform_1, window_bounds = array<i64: 8, 512>}, {transform_indices = @transform_2, window_bounds = array<i64: 512, 4>}, {pipeline_mode = #tpu.pipeline_mode<synchronous>, transform_indices = @transform_3, window_bounds = array<i64: 1, 4>}, {pipeline_mode = #tpu.pipeline_mode<synchronous>, transform_indices = @transform_4, window_bounds = array<i64: 8, 4>}, {transform_indices = @transform_5, window_bounds = array<i64: 8, 512>}, {transform_indices = @transform_6, window_bounds = array<i64: 8, 512>}]} {
    %c0_i32 = arith.constant 0 : i32
    %0 = arith.cmpi eq, %arg0, %c0_i32 : i32
    %1 = arith.extui %0 : i1 to i32
    %c0_i32_0 = arith.constant 0 : i32
    %2 = arith.cmpi ne, %1, %c0_i32_0 : i32
    scf.if %2 {
      %cst_27 = arith.constant 0.000000e+00 : f32
      %54 = vector.broadcast %cst_27 : f32 to vector<8x4xf32>
      %c0_28 = arith.constant 0 : index
      %c0_29 = arith.constant 0 : index
      %55 = vector.load %arg8[%c0_28, %c0_29] : memref<8x4xf32, #tpu.memory_space<vmem>>, vector<8x4xf32>
      tpu.vector_store %arg8[%c0_28, %c0_29], %54 {strides = array<i32>} : memref<8x4xf32, #tpu.memory_space<vmem>>, vector<8x4xf32>,
    } else {
    }
    %c0 = arith.constant 0 : index
    %c0_1 = arith.constant 0 : index
    %3 = vector.load %arg1[%c0, %c0_1] : memref<8x512xf32, #tpu.memory_space<vmem>>, vector<8x512xf32>
    %c0_2 = arith.constant 0 : index
    %c0_3 = arith.constant 0 : index
    %4 = vector.load %arg2[%c0_2, %c0_3] : memref<8x512xf32, #tpu.memory_space<vmem>>, vector<8x512xf32>
    %cst = arith.constant dense<0.000000e+00> : vector<512xf32>
    %5 = vector.multi_reduction <add>, %3, %cst [0] : vector<8x512xf32> to vector<512xf32>
    %6 = vector.shape_cast %5 : vector<512xf32> to vector<1x512xf32>
    %cst_4 = arith.constant 8.000000e+00 : f32
    %7 = vector.broadcast %cst_4 : f32 to vector<1x512xf32>
    %8 = arith.divf %6, %7 : vector<1x512xf32>
    %9 = vector.broadcast %8 : vector<1x512xf32> to vector<8x512xf32>
    %10 = arith.subf %3, %9 : vector<8x512xf32>
    %11 = arith.mulf %10, %10 : vector<8x512xf32>
    %cst_5 = arith.constant dense<0.000000e+00> : vector<512xf32>
    %12 = vector.multi_reduction <add>, %11, %cst_5 [0] : vector<8x512xf32> to vector<512xf32>
    %13 = vector.shape_cast %12 : vector<512xf32> to vector<1x512xf32>
    %cst_6 = arith.constant 8.000000e+00 : f32
    %14 = vector.broadcast %cst_6 : f32 to vector<1x512xf32>
    %15 = arith.divf %13, %14 : vector<1x512xf32>
    %16 = vector.broadcast %8 : vector<1x512xf32> to vector<8x512xf32>
    %17 = arith.subf %3, %16 : vector<8x512xf32>
    %cst_7 = arith.constant 9.99999974E-6 : f32
    %18 = vector.broadcast %cst_7 : f32 to vector<1x512xf32>
    %19 = arith.addf %15, %18 : vector<1x512xf32>
    %20 = math.rsqrt %19 : vector<1x512xf32>
    %21 = vector.broadcast %20 : vector<1x512xf32> to vector<8x512xf32>
    %22 = arith.mulf %17, %21 : vector<8x512xf32>
    %c0_8 = arith.constant 0 : index
    %c0_9 = arith.constant 0 : index
    %23 = vector.load %arg6[%c0_8, %c0_9] : memref<8x512xf32, #tpu.memory_space<vmem>>, vector<8x512xf32>
    tpu.vector_store %arg6[%c0_8, %c0_9], %22 {strides = array<i32>} : memref<8x512xf32, #tpu.memory_space<vmem>>, vector<8x512xf32>,
    %cst_10 = arith.constant dense<0.000000e+00> : vector<512xf32>
    %24 = vector.multi_reduction <add>, %4, %cst_10 [0] : vector<8x512xf32> to vector<512xf32>
    %25 = vector.shape_cast %24 : vector<512xf32> to vector<1x512xf32>
    %cst_11 = arith.constant 8.000000e+00 : f32
    %26 = vector.broadcast %cst_11 : f32 to vector<1x512xf32>
    %27 = arith.divf %25, %26 : vector<1x512xf32>
    %28 = vector.broadcast %27 : vector<1x512xf32> to vector<8x512xf32>
    %29 = arith.subf %4, %28 : vector<8x512xf32>
    %30 = arith.mulf %29, %29 : vector<8x512xf32>
    %cst_12 = arith.constant dense<0.000000e+00> : vector<512xf32>
    %31 = vector.multi_reduction <add>, %30, %cst_12 [0] : vector<8x512xf32> to vector<512xf32>
    %32 = vector.shape_cast %31 : vector<512xf32> to vector<1x512xf32>
    %cst_13 = arith.constant 8.000000e+00 : f32
    %33 = vector.broadcast %cst_13 : f32 to vector<1x512xf32>
    %34 = arith.divf %32, %33 : vector<1x512xf32>
    %35 = vector.broadcast %27 : vector<1x512xf32> to vector<8x512xf32>
    %36 = arith.subf %4, %35 : vector<8x512xf32>
    %cst_14 = arith.constant 9.99999974E-6 : f32
    %37 = vector.broadcast %cst_14 : f32 to vector<1x512xf32>
    %38 = arith.addf %34, %37 : vector<1x512xf32>
    %39 = math.rsqrt %38 : vector<1x512xf32>
    %40 = vector.broadcast %39 : vector<1x512xf32> to vector<8x512xf32>
    %41 = arith.mulf %36, %40 : vector<8x512xf32>
    %c0_15 = arith.constant 0 : index
    %c0_16 = arith.constant 0 : index
    %42 = vector.load %arg7[%c0_15, %c0_16] : memref<8x512xf32, #tpu.memory_space<vmem>>, vector<8x512xf32>
    tpu.vector_store %arg7[%c0_15, %c0_16], %41 {strides = array<i32>} : memref<8x512xf32, #tpu.memory_space<vmem>>, vector<8x512xf32>,
    %43 = arith.addf %3, %4 : vector<8x512xf32>
    %cst_17 = arith.constant 5.000000e-01 : f32
    %44 = vector.broadcast %cst_17 : f32 to vector<8x512xf32>
    %45 = arith.mulf %43, %44 : vector<8x512xf32>
    %c0_18 = arith.constant 0 : index
    %c0_19 = arith.constant 0 : index
    %46 = vector.load %arg8[%c0_18, %c0_19] : memref<8x4xf32, #tpu.memory_space<vmem>>, vector<8x4xf32>
    %c0_20 = arith.constant 0 : index
    %c0_21 = arith.constant 0 : index
    %47 = vector.load %arg3[%c0_20, %c0_21] : memref<512x4xf32, #tpu.memory_space<vmem>>, vector<512x4xf32>
    %cst_22 = arith.constant dense<0.000000e+00> : vector<8x4xf32>
    %48 = tpu.matmul %45, %47, %cst_22 {dimension_numbers = #tpu.dot_dimension_numbers<[1], [0], [0], [1], [0, 0, 1, 1], [], []>} : vector<8x512xf32>, vector<512x4xf32>, vector<8x4xf32> -> vector<8x4xf32>
    %49 = arith.addf %46, %48 : vector<8x4xf32>
    %c0_23 = arith.constant 0 : index
    %c0_24 = arith.constant 0 : index
    %50 = vector.load %arg8[%c0_23, %c0_24] : memref<8x4xf32, #tpu.memory_space<vmem>>, vector<8x4xf32>
    tpu.vector_store %arg8[%c0_23, %c0_24], %49 {strides = array<i32>} : memref<8x4xf32, #tpu.memory_space<vmem>>, vector<8x4xf32>,
    %c0_i32_25 = arith.constant 0 : i32
    %51 = arith.cmpi eq, %arg0, %c0_i32_25 : i32
    %52 = arith.extui %51 : i1 to i32
    %c0_i32_26 = arith.constant 0 : i32
    %53 = arith.cmpi ne, %52, %c0_i32_26 : i32
    scf.if %53 {
      %c0_27 = arith.constant 0 : index
      %c0_28 = arith.constant 0 : index
      %54 = vector.load %arg8[%c0_27, %c0_28] : memref<8x4xf32, #tpu.memory_space<vmem>>, vector<8x4xf32>
      %c0_29 = arith.constant 0 : index
      %c0_30 = arith.constant 0 : index
      %55 = vector.load %arg4[%c0_29, %c0_30] : memref<1x4xf32, #tpu.memory_space<vmem>>, vector<1x4xf32>
      %56 = vector.broadcast %55 : vector<1x4xf32> to vector<8x4xf32>
      %57 = arith.addf %54, %56 : vector<8x4xf32>
      %c0_31 = arith.constant 0 : index
      %c0_32 = arith.constant 0 : index
      %58 = vector.load %arg5[%c0_31, %c0_32] : memref<8x4xf32, #tpu.memory_space<vmem>>, vector<8x4xf32>
      tpu.vector_store %arg5[%c0_31, %c0_32], %57 {strides = array<i32>} : memref<8x4xf32, #tpu.memory_space<vmem>>, vector<8x4xf32>,
    } else {
    }
    return
  }
  func.func @transform_0(%arg0: i32) -> (i32, i32) {
    %c0_i32 = arith.constant 0 : i32
    %c0_i32_0 = arith.constant 0 : i32
    return %c0_i32, %arg0 : i32, i32
  }
  func.func @transform_1(%arg0: i32) -> (i32, i32) {
    %c0_i32 = arith.constant 0 : i32
    %c0_i32_0 = arith.constant 0 : i32
    return %c0_i32, %arg0 : i32, i32
  }
  func.func @transform_2(%arg0: i32) -> (i32, i32) {
    %c0_i32 = arith.constant 0 : i32
    %c0_i32_0 = arith.constant 0 : i32
    return %arg0, %c0_i32 : i32, i32
  }
  func.func @transform_3(%arg0: i32) -> (i32, i32) {
    %c0_i32 = arith.constant 0 : i32
    %c0_i32_0 = arith.constant 0 : i32
    %c0_i32_1 = arith.constant 0 : i32
    return %c0_i32, %c0_i32_0 : i32, i32
  }
  func.func @transform_4(%arg0: i32) -> (i32, i32) {
    %c0_i32 = arith.constant 0 : i32
    %c0_i32_0 = arith.constant 0 : i32
    %c0_i32_1 = arith.constant 0 : i32
    return %c0_i32, %c0_i32_0 : i32, i32
  }
  func.func @transform_5(%arg0: i32) -> (i32, i32) {
    %c0_i32 = arith.constant 0 : i32
    %c0_i32_0 = arith.constant 0 : i32
    return %c0_i32, %arg0 : i32, i32
  }
  func.func @transform_6(%arg0: i32) -> (i32, i32) {
    %c0_i32 = arith.constant 0 : i32
    %c0_i32_0 = arith.constant 0 : i32
    return %c0_i32, %arg0 : i32, i32
  }
}

</mosaic_0001>

<llo_original>
// kernel: tpu_custom_call.1
$region0: #{tpu_custom_call.1}
  #allocation0 [shape = 'u32[]', space=smem, size = 0x4, offset = 0x4, fixed_abs, tag = 'smem constant byte address 0x4 - core index']
  #allocation1 [shape = 'u32[72,128]{1,0:T(1,128)}', space=vmem, size = 0x9000, scoped, tag = 'internal scratch']
  #allocation2 [shape = 'f32[8,4]{1,0:T(8,128)}', space=vmem, size = 0x1000, scoped, tag = 'scratch operand']
  %s0 = inlined_call_operand.vmem [shape: f32[8,512], index: 0, kind: input, shape index: {}]
  %s1 = inlined_call_operand.vmem [shape: f32[8,512], index: 1, kind: input, shape index: {}]
  %s2 = inlined_call_operand.vmem [shape: f32[512,4], index: 2, kind: input, shape index: {}]
  %s3 = inlined_call_operand.vmem [shape: f32[1,4], index: 3, kind: input, shape index: {}]
  %s4 = inlined_call_operand.vmem [shape: f32[8,4], index: 4, kind: output, shape index: {0}]
  %s5 = inlined_call_operand.hbm [shape: f32[8,512], index: 5, kind: output, shape index: {1}]
  %s6 = inlined_call_operand.hbm [shape: f32[8,512], index: 6, kind: output, shape index: {2}]
  %7 = xla_tuple %s4, %s5, %s6
  %s8 = sld [smem:[#allocation0]]
  $region50: #{tpu_custom_call.1} parent=0
    _
  %s10 = ssub.s32 1, %s8
  %s11 = scalar_select 0, %s10, %s8
  $region1: #{tpu_custom_call.1} parent=0
    #allocation3 [shape = 'u8[16384]{0}', space=vmem, size = 0x4000, scoped, tag = 'output window, operand 1, single buffered']
    #allocation4 [shape = 's32[1]{0}', space=sflag, size = 0x4, scoped, tag = 'scoped memory for tpu_custom_call.1']
    #allocation5 [shape = 'u8[16384]{0}', space=vmem, size = 0x4000, scoped, tag = 'output window, operand 2, single buffered']
    #allocation6 [shape = 's32[1]{0}', space=sflag, size = 0x4, scoped, tag = 'scoped memory for tpu_custom_call.1']
    %12 = vsyncpa [#allocation4], 0
    %13 = vsyncpa [#allocation6], 0
    // Predicated region
    $region2: #{tpu_custom_call.1} parent=1 // pred_check
      _
    $region3: #{tpu_custom_call.1} parent=1 // pred_check_branch
      %15 = sbr.rel (0) target = $region5
    $region4: #{tpu_custom_call.1} parent=1 // pred_region
      _
    $region5: #{tpu_custom_call.1} parent=1 // pred_fallthru
      _
    // Predicated region
    $region6: #{tpu_custom_call.1} parent=1 // pred_check
      _
    $region7: #{tpu_custom_call.1} parent=1 // pred_check_branch
      %17 = sbr.rel (0) target = $region9
    $region8: #{tpu_custom_call.1} parent=1 // pred_region
      _
    $region9: #{tpu_custom_call.1} parent=1 // pred_fallthru
      _
    // Predicated region
    $region10: #{tpu_custom_call.1} parent=1 // pred_check
      _
    $region11: #{tpu_custom_call.1} parent=1 // pred_check_branch
      %19 = sbr.rel (0) target = $region13
    $region12: #{tpu_custom_call.1} parent=1 // pred_region
      _
    $region13: #{tpu_custom_call.1} parent=1 // pred_fallthru
      _
    // Predicated region
    $region14: #{tpu_custom_call.1} parent=1 // pred_check
      _
    $region15: #{tpu_custom_call.1} parent=1 // pred_check_branch
      %21 = sbr.rel (0) target = $region17
    $region16: #{tpu_custom_call.1} parent=1 // pred_region
      _
    $region17: #{tpu_custom_call.1} parent=1 // pred_fallthru
      _
    %p22 = scmp.eq.s32.totalorder 0, 0
    // Predicated region
    $region18: #{tpu_custom_call.1} parent=1 // pred_check
      %p23 = pneg %p22
    $region19: #{tpu_custom_call.1} parent=1 // pred_check_branch
      %25 = sbr.rel (%p23) target = $region21
    $region20: #{tpu_custom_call.1} parent=1 // pred_region
      %vm26 = vcmask 31744
      %27 = vst.msk [vmem:[#allocation2] sm:$0xff] %vm26, 0.0
    $region21: #{tpu_custom_call.1} parent=1 // pred_fallthru
      _
    %v28 = vld [vmem:[%s0] sm:$0xff]
    %v29 = vld [vmem:[%s0 + $0x8] sm:$0xff]
    %v30 = vld [vmem:[%s0 + $0x10] sm:$0xff]
    %v31 = vld [vmem:[%s0 + $0x18] sm:$0xff]
    %v32 = vld [vmem:[%s1] sm:$0xff]
    %v33 = vld [vmem:[%s1 + $0x8] sm:$0xff]
    %v34 = vld [vmem:[%s1 + $0x10] sm:$0xff]
    %v35 = vld [vmem:[%s1 + $0x18] sm:$0xff]
    %v36 = vrot.slane %v28, 4
    %v37 = vadd.f32 %v28, %v36
    %v38 = vrot.slane %v37, 2
    %v39 = vadd.f32 %v37, %v38
    %v40 = vrot.slane %v39, 1
    %v41 = vadd.f32 %v39, %v40
    %v42 = vrot.slane %v29, 4
    %v43 = vadd.f32 %v29, %v42
    %v44 = vrot.slane %v43, 2
    %v45 = vadd.f32 %v43, %v44
    %v46 = vrot.slane %v45, 1
    %v47 = vadd.f32 %v45, %v46
    %v48 = vrot.slane %v30, 4
    %v49 = vadd.f32 %v30, %v48
    %v50 = vrot.slane %v49, 2
    %v51 = vadd.f32 %v49, %v50
    %v52 = vrot.slane %v51, 1
    %v53 = vadd.f32 %v51, %v52
    %v54 = vrot.slane %v31, 4
    %v55 = vadd.f32 %v31, %v54
    %v56 = vrot.slane %v55, 2
    %v57 = vadd.f32 %v55, %v56
    %v58 = vrot.slane %v57, 1
    %v59 = vadd.f32 %v57, %v58
    %v60 = vrcp.pop 8.0
    %v61 = vmul.f32 8.0, %v60
    %v62 = vsub.f32 1.0, %v61
    %v63 = vmul.f32 %v60, %v62
    %v64 = vadd.f32 %v60, %v63
    %vm65 = vweird.f32 %v60
    %v66 = vsel %vm65, %v60, %v64
    %v67 = vmul.f32 %v41, %v66
    %v68 = vmul.f32 %v47, %v66
    %v69 = vmul.f32 %v53, %v66
    %v70 = vmul.f32 %v59, %v66
    %v71 = vsub.f32 %v28, %v67
    %v72 = vsub.f32 %v29, %v68
    %v73 = vsub.f32 %v30, %v69
    %v74 = vsub.f32 %v31, %v70
    %v75 = vmul.f32 %v71, %v71
    %v76 = vmul.f32 %v72, %v72
    %v77 = vmul.f32 %v73, %v73
    %v78 = vmul.f32 %v74, %v74
    %v79 = vrot.slane %v75, 4
    %v80 = vadd.f32 %v75, %v79
    %v81 = vrot.slane %v80, 2
    %v82 = vadd.f32 %v80, %v81
    %v83 = vrot.slane %v82, 1
    %v84 = vadd.f32 %v82, %v83
    %v85 = vrot.slane %v76, 4
    %v86 = vadd.f32 %v76, %v85
    %v87 = vrot.slane %v86, 2
    %v88 = vadd.f32 %v86, %v87
    %v89 = vrot.slane %v88, 1
    %v90 = vadd.f32 %v88, %v89
    %v91 = vrot.slane %v77, 4
    %v92 = vadd.f32 %v77, %v91
    %v93 = vrot.slane %v92, 2
    %v94 = vadd.f32 %v92, %v93
    %v95 = vrot.slane %v94, 1
    %v96 = vadd.f32 %v94, %v95
    %v97 = vrot.slane %v78, 4
    %v98 = vadd.f32 %v78, %v97
    %v99 = vrot.slane %v98, 2
    %v100 = vadd.f32 %v98, %v99
    %v101 = vrot.slane %v100, 1
    %v102 = vadd.f32 %v100, %v101
    %v103 = vmul.f32 %v84, %v66
    %v104 = vmul.f32 %v90, %v66
    %v105 = vmul.f32 %v96, %v66
    %v106 = vmul.f32 %v102, %v66
    %v107 = vadd.f32 %v103, 1e-05
    %v108 = vadd.f32 %v104, 1e-05
    %v109 = vadd.f32 %v105, 1e-05
    %v110 = vadd.f32 %v106, 1e-05
    %v111 = vrsqrt.pop %v107
    %v112 = vmul.f32 %v111, %v107
    %v113 = vmul.f32 %v112, %v111
    %v114 = vmul.f32 0.5, %v113
    %v115 = vsub.f32 1.5, %v114
    %v116 = vmul.f32 %v111, %v115
    %vm117 = vweird.f32 %v107
    %vm118 = vweird.f32 %v111
    %vm119 = vmor %vm117, %vm118
    %v120 = vsel %vm119, %v111, %v116
    %v121 = vrsqrt.pop %v108
    %v122 = vmul.f32 %v121, %v108
    %v123 = vmul.f32 %v122, %v121
    %v124 = vmul.f32 0.5, %v123
    %v125 = vsub.f32 1.5, %v124
    %v126 = vmul.f32 %v121, %v125
    %vm127 = vweird.f32 %v108
    %vm128 = vweird.f32 %v121
    %vm129 = vmor %vm127, %vm128
    %v130 = vsel %vm129, %v121, %v126
    %v131 = vrsqrt.pop %v109
    %v132 = vmul.f32 %v131, %v109
    %v133 = vmul.f32 %v132, %v131
    %v134 = vmul.f32 0.5, %v133
    %v135 = vsub.f32 1.5, %v134
    %v136 = vmul.f32 %v131, %v135
    %vm137 = vweird.f32 %v109
    %vm138 = vweird.f32 %v131
    %vm139 = vmor %vm137, %vm138
    %v140 = vsel %vm139, %v131, %v136
    %v141 = vrsqrt.pop %v110
    %v142 = vmul.f32 %v141, %v110
    %v143 = vmul.f32 %v142, %v141
    %v144 = vmul.f32 0.5, %v143
    %v145 = vsub.f32 1.5, %v144
    %v146 = vmul.f32 %v141, %v145
    %vm147 = vweird.f32 %v110
    %vm148 = vweird.f32 %v141
    %vm149 = vmor %vm147, %vm148
    %v150 = vsel %vm149, %v141, %v146
    %v151 = vmul.f32 %v71, %v120
    %v152 = vmul.f32 %v72, %v130
    %v153 = vmul.f32 %v73, %v140
    %v154 = vmul.f32 %v74, %v150
    %155 = vst [vmem:[#allocation3] sm:$0xff] %v151
    %156 = vst [vmem:[#allocation3 + $0x8] sm:$0xff] %v152
    %157 = vst [vmem:[#allocation3 + $0x10] sm:$0xff] %v153
    %158 = vst [vmem:[#allocation3 + $0x18] sm:$0xff] %v154
    %v159 = vrot.slane %v32, 4
    %v160 = vadd.f32 %v32, %v159
    %v161 = vrot.slane %v160, 2
    %v162 = vadd.f32 %v160, %v161
    %v163 = vrot.slane %v162, 1
    %v164 = vadd.f32 %v162, %v163
    %v165 = vrot.slane %v33, 4
    %v166 = vadd.f32 %v33, %v165
    %v167 = vrot.slane %v166, 2
    %v168 = vadd.f32 %v166, %v167
    %v169 = vrot.slane %v168, 1
    %v170 = vadd.f32 %v168, %v169
    %v171 = vrot.slane %v34, 4
    %v172 = vadd.f32 %v34, %v171
    %v173 = vrot.slane %v172, 2
    %v174 = vadd.f32 %v172, %v173
    %v175 = vrot.slane %v174, 1
    %v176 = vadd.f32 %v174, %v175
    %v177 = vrot.slane %v35, 4
    %v178 = vadd.f32 %v35, %v177
    %v179 = vrot.slane %v178, 2
    %v180 = vadd.f32 %v178, %v179
    %v181 = vrot.slane %v180, 1
    %v182 = vadd.f32 %v180, %v181
    %v183 = vmul.f32 %v164, %v66
    %v184 = vmul.f32 %v170, %v66
    %v185 = vmul.f32 %v176, %v66
    %v186 = vmul.f32 %v182, %v66
    %v187 = vsub.f32 %v32, %v183
    %v188 = vsub.f32 %v33, %v184
    %v189 = vsub.f32 %v34, %v185
    %v190 = vsub.f32 %v35, %v186
    %v191 = vmul.f32 %v187, %v187
    %v192 = vmul.f32 %v188, %v188
    %v193 = vmul.f32 %v189, %v189
    %v194 = vmul.f32 %v190, %v190
    %v195 = vrot.slane %v191, 4
    %v196 = vadd.f32 %v191, %v195
    %v197 = vrot.slane %v196, 2
    %v198 = vadd.f32 %v196, %v197
    %v199 = vrot.slane %v198, 1
    %v200 = vadd.f32 %v198, %v199
    %v201 = vrot.slane %v192, 4
    %v202 = vadd.f32 %v192, %v201
    %v203 = vrot.slane %v202, 2
    %v204 = vadd.f32 %v202, %v203
    %v205 = vrot.slane %v204, 1
    %v206 = vadd.f32 %v204, %v205
    %v207 = vrot.slane %v193, 4
    %v208 = vadd.f32 %v193, %v207
    %v209 = vrot.slane %v208, 2
    %v210 = vadd.f32 %v208, %v209
    %v211 = vrot.slane %v210, 1
    %v212 = vadd.f32 %v210, %v211
    %v213 = vrot.slane %v194, 4
    %v214 = vadd.f32 %v194, %v213
    %v215 = vrot.slane %v214, 2
    %v216 = vadd.f32 %v214, %v215
    %v217 = vrot.slane %v216, 1
    %v218 = vadd.f32 %v216, %v217
    %v219 = vmul.f32 %v200, %v66
    %v220 = vmul.f32 %v206, %v66
    %v221 = vmul.f32 %v212, %v66
    %v222 = vmul.f32 %v218, %v66
    %v223 = vadd.f32 %v219, 1e-05
    %v224 = vadd.f32 %v220, 1e-05
    %v225 = vadd.f32 %v221, 1e-05
    %v226 = vadd.f32 %v222, 1e-05
    %v227 = vrsqrt.pop %v223
    %v228 = vmul.f32 %v227, %v223
    %v229 = vmul.f32 %v228, %v227
    %v230 = vmul.f32 0.5, %v229
    %v231 = vsub.f32 1.5, %v230
    %v232 = vmul.f32 %v227, %v231
    %vm233 = vweird.f32 %v223
    %vm234 = vweird.f32 %v227
    %vm235 = vmor %vm233, %vm234
    %v236 = vsel %vm235, %v227, %v232
    %v237 = vrsqrt.pop %v224
    %v238 = vmul.f32 %v237, %v224
    %v239 = vmul.f32 %v238, %v237
    %v240 = vmul.f32 0.5, %v239
    %v241 = vsub.f32 1.5, %v240
    %v242 = vmul.f32 %v237, %v241
    %vm243 = vweird.f32 %v224
    %vm244 = vweird.f32 %v237
    %vm245 = vmor %vm243, %vm244
    %v246 = vsel %vm245, %v237, %v242
    %v247 = vrsqrt.pop %v225
    %v248 = vmul.f32 %v247, %v225
    %v249 = vmul.f32 %v248, %v247
    %v250 = vmul.f32 0.5, %v249
    %v251 = vsub.f32 1.5, %v250
    %v252 = vmul.f32 %v247, %v251
    %vm253 = vweird.f32 %v225
    %vm254 = vweird.f32 %v247
    %vm255 = vmor %vm253, %vm254
    %v256 = vsel %vm255, %v247, %v252
    %v257 = vrsqrt.pop %v226
    %v258 = vmul.f32 %v257, %v226
    %v259 = vmul.f32 %v258, %v257
    %v260 = vmul.f32 0.5, %v259
    %v261 = vsub.f32 1.5, %v260
    %v262 = vmul.f32 %v257, %v261
    %vm263 = vweird.f32 %v226
    %vm264 = vweird.f32 %v257
    %vm265 = vmor %vm263, %vm264
    %v266 = vsel %vm265, %v257, %v262
    %v267 = vmul.f32 %v187, %v236
    %v268 = vmul.f32 %v188, %v246
    %v269 = vmul.f32 %v189, %v256
    %v270 = vmul.f32 %v190, %v266
    %271 = vst [vmem:[#allocation5] sm:$0xff] %v267
    %272 = vst [vmem:[#allocation5 + $0x8] sm:$0xff] %v268
    %273 = vst [vmem:[#allocation5 + $0x10] sm:$0xff] %v269
    %274 = vst [vmem:[#allocation5 + $0x18] sm:$0xff] %v270
    %v275 = vadd.f32 %v28, %v32
    %v276 = vadd.f32 %v29, %v33
    %v277 = vadd.f32 %v30, %v34
    %v278 = vadd.f32 %v31, %v35
    %v279 = vmul.f32 %v275, 0.5
    %v280 = vmul.f32 %v276, 0.5
    %v281 = vmul.f32 %v277, 0.5
    %v282 = vmul.f32 %v278, 0.5
    %v283 = vld [vmem:[#allocation2] sm:$0xff]
    %v284 = vld [vmem:[%s2] sm:$0xff]
    %v285 = vld [vmem:[%s2 + $0x8] sm:$0xff]
    %v286 = vld [vmem:[%s2 + $0x10] sm:$0xff]
    %v287 = vld [vmem:[%s2 + $0x18] sm:$0xff]
    %v288 = vld [vmem:[%s2 + $0x20] sm:$0xff]
    %v289 = vld [vmem:[%s2 + $0x28] sm:$0xff]
    %v290 = vld [vmem:[%s2 + $0x30] sm:$0xff]
    %v291 = vld [vmem:[%s2 + $0x38] sm:$0xff]
    %v292 = vld [vmem:[%s2 + $0x40] sm:$0xff]
    %v293 = vld [vmem:[%s2 + $0x48] sm:$0xff]
    %v294 = vld [vmem:[%s2 + $0x50] sm:$0xff]
    %v295 = vld [vmem:[%s2 + $0x58] sm:$0xff]
    %v296 = vld [vmem:[%s2 + $0x60] sm:$0xff]
    %v297 = vld [vmem:[%s2 + $0x68] sm:$0xff]
    %v298 = vld [vmem:[%s2 + $0x70] sm:$0xff]
    %v299 = vld [vmem:[%s2 + $0x78] sm:$0xff]
    %v300 = vld [vmem:[%s2 + $0x80] sm:$0xff]
    %v301 = vld [vmem:[%s2 + $0x88] sm:$0xff]
    %v302 = vld [vmem:[%s2 + $0x90] sm:$0xff]
    %v303 = vld [vmem:[%s2 + $0x98] sm:$0xff]
    %v304 = vld [vmem:[%s2 + $0xa0] sm:$0xff]
    %v305 = vld [vmem:[%s2 + $0xa8] sm:$0xff]
    %v306 = vld [vmem:[%s2 + $0xb0] sm:$0xff]
    %v307 = vld [vmem:[%s2 + $0xb8] sm:$0xff]
    %v308 = vld [vmem:[%s2 + $0xc0] sm:$0xff]
    %v309 = vld [vmem:[%s2 + $0xc8] sm:$0xff]
    %v310 = vld [vmem:[%s2 + $0xd0] sm:$0xff]
    %v311 = vld [vmem:[%s2 + $0xd8] sm:$0xff]
    %v312 = vld [vmem:[%s2 + $0xe0] sm:$0xff]
    %v313 = vld [vmem:[%s2 + $0xe8] sm:$0xff]
    %v314 = vld [vmem:[%s2 + $0xf0] sm:$0xff]
    %v315 = vld [vmem:[%s2 + $0xf8] sm:$0xff]
    %v316 = vld [vmem:[%s2 + $0x100] sm:$0xff]
    %v317 = vld [vmem:[%s2 + $0x108] sm:$0xff]
    %v318 = vld [vmem:[%s2 + $0x110] sm:$0xff]
    %v319 = vld [vmem:[%s2 + $0x118] sm:$0xff]
    %v320 = vld [vmem:[%s2 + $0x120] sm:$0xff]
    %v321 = vld [vmem:[%s2 + $0x128] sm:$0xff]
    %v322 = vld [vmem:[%s2 + $0x130] sm:$0xff]
    %v323 = vld [vmem:[%s2 + $0x138] sm:$0xff]
    %v324 = vld [vmem:[%s2 + $0x140] sm:$0xff]
    %v325 = vld [vmem:[%s2 + $0x148] sm:$0xff]
    %v326 = vld [vmem:[%s2 + $0x150] sm:$0xff]
    %v327 = vld [vmem:[%s2 + $0x158] sm:$0xff]
    %v328 = vld [vmem:[%s2 + $0x160] sm:$0xff]
    %v329 = vld [vmem:[%s2 + $0x168] sm:$0xff]
    %v330 = vld [vmem:[%s2 + $0x170] sm:$0xff]
    %v331 = vld [vmem:[%s2 + $0x178] sm:$0xff]
    %v332 = vld [vmem:[%s2 + $0x180] sm:$0xff]
    %v333 = vld [vmem:[%s2 + $0x188] sm:$0xff]
    %v334 = vld [vmem:[%s2 + $0x190] sm:$0xff]
    %v335 = vld [vmem:[%s2 + $0x198] sm:$0xff]
    %v336 = vld [vmem:[%s2 + $0x1a0] sm:$0xff]
    %v337 = vld [vmem:[%s2 + $0x1a8] sm:$0xff]
    %v338 = vld [vmem:[%s2 + $0x1b0] sm:$0xff]
    %v339 = vld [vmem:[%s2 + $0x1b8] sm:$0xff]
    %v340 = vld [vmem:[%s2 + $0x1c0] sm:$0xff]
    %v341 = vld [vmem:[%s2 + $0x1c8] sm:$0xff]
    %v342 = vld [vmem:[%s2 + $0x1d0] sm:$0xff]
    %v343 = vld [vmem:[%s2 + $0x1d8] sm:$0xff]
    %v344 = vld [vmem:[%s2 + $0x1e0] sm:$0xff]
    %v345 = vld [vmem:[%s2 + $0x1e8] sm:$0xff]
    %v346 = vld [vmem:[%s2 + $0x1f0] sm:$0xff]
    %v347 = vld [vmem:[%s2 + $0x1f8] sm:$0xff]
    %348 = vmatpush.msra.mxu0 %v299
    %349 = vmatpush.msra.mxu0 %v298
    %350 = vmatpush.msra.mxu0 %v297
    %351 = vmatpush.msra.mxu0 %v296
    %352 = vmatpush.msra.mxu0 %v295
    %353 = vmatpush.msra.mxu0 %v294
    %354 = vmatpush.msra.mxu0 %v293
    %355 = vmatpush.msra.mxu0 %v292
    %356 = vmatpush.msra.mxu0 %v291
    %357 = vmatpush.msra.mxu0 %v290
    %358 = vmatpush.msra.mxu0 %v289
    %359 = vmatpush.msra.mxu0 %v288
    %360 = vmatpush.msra.mxu0 %v287
    %361 = vmatpush.msra.mxu0 %v286
    %362 = vmatpush.msra.mxu0 %v285
    %363 = vmatpush.msra.mxu0 %v284
    %364 = vmatmul.f32.gmra.mxu0 %v279
    %v365 = vpop.f32.mrf.mxu0
    %v366 = vadd.f32 0.0, %v365
    %367 = vdwg.mxu0
    %368 = vmatpush.msra.mxu0 %v315
    %369 = vmatpush.msra.mxu0 %v314
    %370 = vmatpush.msra.mxu0 %v313
    %371 = vmatpush.msra.mxu0 %v312
    %372 = vmatpush.msra.mxu0 %v311
    %373 = vmatpush.msra.mxu0 %v310
    %374 = vmatpush.msra.mxu0 %v309
    %375 = vmatpush.msra.mxu0 %v308
    %376 = vmatpush.msra.mxu0 %v307
    %377 = vmatpush.msra.mxu0 %v306
    %378 = vmatpush.msra.mxu0 %v305
    %379 = vmatpush.msra.mxu0 %v304
    %380 = vmatpush.msra.mxu0 %v303
    %381 = vmatpush.msra.mxu0 %v302
    %382 = vmatpush.msra.mxu0 %v301
    %383 = vmatpush.msra.mxu0 %v300
    %384 = vmatmul.f32.gmra.mxu0 %v280
    %v385 = vpop.f32.mrf.mxu0
    %v386 = vadd.f32 %v366, %v385
    %387 = vdwg.mxu0
    %388 = vmatpush.msra.mxu0 %v331
    %389 = vmatpush.msra.mxu0 %v330
    %390 = vmatpush.msra.mxu0 %v329
    %391 = vmatpush.msra.mxu0 %v328
    %392 = vmatpush.msra.mxu0 %v327
    %393 = vmatpush.msra.mxu0 %v326
    %394 = vmatpush.msra.mxu0 %v325
    %395 = vmatpush.msra.mxu0 %v324
    %396 = vmatpush.msra.mxu0 %v323
    %397 = vmatpush.msra.mxu0 %v322
    %398 = vmatpush.msra.mxu0 %v321
    %399 = vmatpush.msra.mxu0 %v320
    %400 = vmatpush.msra.mxu0 %v319
    %401 = vmatpush.msra.mxu0 %v318
    %402 = vmatpush.msra.mxu0 %v317
    %403 = vmatpush.msra.mxu0 %v316
    %404 = vmatmul.f32.gmra.mxu0 %v281
    %v405 = vpop.f32.mrf.mxu0
    %v406 = vadd.f32 %v386, %v405
    %407 = vdwg.mxu0
    %408 = vmatpush.msra.mxu0 %v347
    %409 = vmatpush.msra.mxu0 %v346
    %410 = vmatpush.msra.mxu0 %v345
    %411 = vmatpush.msra.mxu0 %v344
    %412 = vmatpush.msra.mxu0 %v343
    %413 = vmatpush.msra.mxu0 %v342
    %414 = vmatpush.msra.mxu0 %v341
    %415 = vmatpush.msra.mxu0 %v340
    %416 = vmatpush.msra.mxu0 %v339
    %417 = vmatpush.msra.mxu0 %v338
    %418 = vmatpush.msra.mxu0 %v337
    %419 = vmatpush.msra.mxu0 %v336
    %420 = vmatpush.msra.mxu0 %v335
    %421 = vmatpush.msra.mxu0 %v334
    %422 = vmatpush.msra.mxu0 %v333
    %423 = vmatpush.msra.mxu0 %v332
    %424 = vmatmul.f32.gmra.mxu0 %v282
    %v425 = vpop.f32.mrf.mxu0
    %v426 = vadd.f32 %v406, %v425
    %427 = vdwg.mxu0
    %v428 = vadd.f32 %v283, %v426
    %vm429 = vcmask 31744
    %430 = vst.msk [vmem:[#allocation2] sm:$0xff] %vm429, %v428
    // Predicated region
    $region22: #{tpu_custom_call.1} parent=1 // pred_check
      %p431 = pneg %p22
    $region23: #{tpu_custom_call.1} parent=1 // pred_check_branch
      %433 = sbr.rel (%p431) target = $region25
    $region24: #{tpu_custom_call.1} parent=1 // pred_region
      %v434 = vld [vmem:[#allocation2] sm:$0xff]
      %v435 = vld [vmem:[%s3] sm:$0x1]
      %v437 = vperm.slane %v435, 0
      %v439 = vadd.f32 %v434, %v437
      %440 = vst.msk [vmem:[%s4] sm:$0xff] %vm429, %v439
    $region25: #{tpu_custom_call.1} parent=1 // pred_fallthru
      _
    // Predicated region
    $region26: #{tpu_custom_call.1} parent=1 // pred_check
      _
    $region27: #{tpu_custom_call.1} parent=1 // pred_check_branch
      %442 = sbr.rel (0) target = $region29
    $region28: #{tpu_custom_call.1} parent=1 // pred_region
      _
    $region29: #{tpu_custom_call.1} parent=1 // pred_fallthru
      _
    // Predicated region
    $region30: #{tpu_custom_call.1} parent=1 // pred_check
      _
    $region31: #{tpu_custom_call.1} parent=1 // pred_check_branch
      %444 = sbr.rel (0) target = $region33
    $region32: #{tpu_custom_call.1} parent=1 // pred_region
      %446 = vsyncadd [#allocation4], 0
      %s448 = sshll.u32 [#allocation3], 4
      %s449 = int_to_ptr.vmem [resolvable:$true] %s448
      %s450 = sshll.u32 %s5, 4
      %s451 = int_to_ptr.hbm [resolvable:$true] %s450
      %453 = dma.vmem_to_hbm [thread:$0]  %s449, 512, %s451, [#allocation4]
    $region33: #{tpu_custom_call.1} parent=1 // pred_fallthru
      _
    // Predicated region
    $region34: #{tpu_custom_call.1} parent=1 // pred_check
      _
    $region35: #{tpu_custom_call.1} parent=1 // pred_check_branch
      %455 = sbr.rel (0) target = $region37
    $region36: #{tpu_custom_call.1} parent=1 // pred_region
      %457 = vsyncadd [#allocation6], 0
      %s459 = sshll.u32 [#allocation5], 4
      %s460 = int_to_ptr.vmem [resolvable:$true] %s459
      %s461 = sshll.u32 %s6, 4
      %s462 = int_to_ptr.hbm [resolvable:$true] %s461
      %464 = dma.vmem_to_hbm [thread:$0]  %s460, 512, %s462, [#allocation6]
    $region37: #{tpu_custom_call.1} parent=1 // pred_fallthru
      _
    // Predicated region
    $region38: #{tpu_custom_call.1} parent=1 // pred_check
      _
    $region39: #{tpu_custom_call.1} parent=1 // pred_check_branch
      %466 = sbr.rel (0) target = $region41
    $region40: #{tpu_custom_call.1} parent=1 // pred_region
      _
    $region41: #{tpu_custom_call.1} parent=1 // pred_fallthru
      _
    // Predicated region
    $region42: #{tpu_custom_call.1} parent=1 // pred_check
      _
    $region43: #{tpu_custom_call.1} parent=1 // pred_check_branch
      %468 = sbr.rel (0) target = $region45
    $region44: #{tpu_custom_call.1} parent=1 // pred_region
      %470 = dma.done [#allocation4], 512
    $region45: #{tpu_custom_call.1} parent=1 // pred_fallthru
      _
    // Predicated region
    $region46: #{tpu_custom_call.1} parent=1 // pred_check
      _
    $region47: #{tpu_custom_call.1} parent=1 // pred_check_branch
      %472 = sbr.rel (0) target = $region49
    $region48: #{tpu_custom_call.1} parent=1 // pred_region
      %474 = dma.done [#allocation6], 512
    $region49: #{tpu_custom_call.1} parent=1 // pred_fallthru
      _
    %475 = vsyncpa [#allocation4], 1
    %476 = vsyncpa [#allocation6], 1

</llo_original>
